<compile_context>
chip_gen: v7x
topology: tpu7x:2x2x1
jax: 0.10.0
libtpu: 0.0.40
codegen_flags: <defaults>
</compile_context>

<pallas_src>
import functools

import jax
import jax.numpy as jnp
import numpy as np
from jax.experimental import pallas as pl
from jax.experimental.pallas import tpu as pltpu

_LANE = 128
_MIB = 1024 * 1024


def _divisors_desc(n):
    return [d for d in range(n, 0, -1) if n % d == 0]


def _round_up(x, m):
    return -(-x // m) * m


def _sublane(dtype):
    return max(8, 32 // jnp.dtype(dtype).itemsize)


def _padded_bytes(c, t, s, dtype):
    """VMEM bytes of a (c, t, s) block, including sublane/lane tile padding."""
    return (c * _round_up(t, _sublane(dtype)) * _round_up(s, _LANE)
            * jnp.dtype(dtype).itemsize)


def _tpu_vmem_capacity_bytes():
    """Per-core VMEM capacity; conservative 64 MiB (v7x) fallback if unknown."""
    try:
        cap = getattr(pltpu.get_tpu_info(), "vmem_capacity_bytes", None)
        if cap:
            return int(cap)
    except Exception:
        pass
    return 64 * _MIB


def _choose_tiles(c, t, s, dtype, budget_bytes):
    """Pick (tile_c, tile_s) for a streaming (1, tile_c, t, tile_s) block.

    Prefer tile_s == s (each (c, t) row is one long contiguous DMA segment) and
    shrink tile_c first; only split S on lane-dense 128 boundaries if even a
    (1, 1, t, s) block overflows the budget."""
    for tc in _divisors_desc(c):
        if _padded_bytes(tc, t, s, dtype) <= budget_bytes:
            return tc, s
    if s % _LANE == 0:
        for d in _divisors_desc(s // _LANE):
            ts = d * _LANE
            if _padded_bytes(1, t, ts, dtype) <= budget_bytes:
                return 1, ts
        return 1, _LANE
    # TODO(synk): non-128-divisible S that still overflows the budget at tile_c == 1;
    # the full-S fallback is correct but uses masked stores and an oversized block.
    return 1, s


# --------------------------------------------------------------------- kernels
def _fused_kernel(x_ref, w1t_ref, w2_ref, o_ref, *, inv_count):
    xb = x_ref[0]                                                    # (C, T, S)
    csum = jnp.sum(xb.astype(jnp.float32), axis=0)                   # (T, S)  VPU adds
    pooled = jnp.sum(csum, axis=-1, keepdims=True) * inv_count       # (T, 1)  lane reduce
    hid = jnp.maximum(
        jnp.sum(w1t_ref[...] * pooled, axis=0, keepdims=True), 0.0)  # (1, T_red)
    gate = jnp.sum(w2_ref[...] * hid, axis=-1, keepdims=True)        # (T, 1)
    mult = 0.5 + jax.nn.sigmoid(gate)                                # (T, 1) f32
    # out = x + x*(sigmoid - 0.5) == x * (0.5 + sigmoid); multiply in f32, cast on store.
    o_ref[0] = (xb * mult[None, :, :]).astype(o_ref.dtype)


def _pool_excite_kernel(x_ref, w1t_ref, w2_ref, scale_ref, acc_ref, *, inv_count):
    ci = pl.program_id(1)
    si = pl.program_id(2)
    is_first = jnp.logical_and(ci == 0, si == 0)
    is_last = jnp.logical_and(ci == pl.num_programs(1) - 1,
                              si == pl.num_programs(2) - 1)

    @pl.when(is_first)
    def _():
        acc_ref[...] = jnp.zeros_like(acc_ref)

    # Per-tile work is pure VPU: fold the channel axis with elementwise adds into a
    # lane-shaped (T, TILE_S) f32 accumulator (spatial tiles may land on the same
    # lanes -- fine, the epilogue reduces over all lanes anyway).
    acc_ref[...] += jnp.sum(x_ref[0].astype(jnp.float32), axis=0)

    @pl.when(is_last)
    def _():
        pooled = jnp.sum(acc_ref[...], axis=-1, keepdims=True) * inv_count     # (T, 1)
        hid = jnp.maximum(
            jnp.sum(w1t_ref[...] * pooled, axis=0, keepdims=True), 0.0)        # (1, T_red)
        gate = jnp.sum(w2_ref[...] * hid, axis=-1, keepdims=True)              # (T, 1)
        # out = x + x*(sigmoid - 0.5)  ==  x * (0.5 + sigmoid)
        scale_ref[...] = (0.5 + jax.nn.sigmoid(gate))[None]                    # (1, T, 1)


def _scale_kernel(x_ref, scale_ref, o_ref):
    m = scale_ref[0]                                   # (T, 1) f32 multiplier
    # Multiply in f32 (dtype promotion), cast only on the store.
    o_ref[0] = (x_ref[0] * m[None, :, :]).astype(o_ref.dtype)


# --------------------------------------------------------------------- wrapper
def se_layer_t(x, w1, w2, *, block_budget_bytes=None, allow_fused=True):
    """SELayerT forward. x: (N, C, T, H, W); w1: (T//r, T); w2: (T, T//r)."""
    n, c, t, h, w = x.shape
    s = h * w
    t_red = w1.shape[0]
    assert w1.shape == (t_red, t), "w1 must be (T//reduction, T)"
    assert w2.shape == (t, t_red), "w2 must be (T, T//reduction)"

    x4 = x.reshape(n, c, t, s)      # free reshape; memory order unchanged
    w1t = w1.T                      # (T, T_red): first matvec reduces over sublanes
    inv_count = 1.0 / float(c * s)  # mean over (C, H, W) per (b, t)

    vmem_cap = _tpu_vmem_capacity_bytes()
    hard_cap = int(0.75 * vmem_cap)          # leave headroom for compiler scratch
    headroom = 4 * _MIB

    # ---------------------------------------------------------- fused single pass
    sample_in = _padded_bytes(c, t, s, x.dtype)
    sample_f32 = _padded_bytes(c, t, s, jnp.float32)
    fused_need = 4 * sample_in + 2 * sample_f32 + headroom   # 2x in + 2x out + f32 temps
    if allow_fused and fused_need <= hard_cap:
        out4 = pl.pallas_call(
            functools.partial(_fused_kernel, inv_count=inv_count),
            out_shape=jax.ShapeDtypeStruct((n, c, t, s), x.dtype),
            grid_spec=pltpu.PrefetchScalarGridSpec(
                num_scalar_prefetch=0,
                grid=(n,),
                in_specs=[
                    pl.BlockSpec((1, c, t, s), lambda b: (b, 0, 0, 0)),
                    pl.BlockSpec((t, t_red), lambda b: (0, 0)),
                    pl.BlockSpec((t, t_red), lambda b: (0, 0)),
                ],
                out_specs=pl.BlockSpec((1, c, t, s), lambda b: (b, 0, 0, 0)),
            ),
            compiler_params=pltpu.CompilerParams(
                dimension_semantics=("parallel",),
                vmem_limit_bytes=int(min(max(fused_need, 16 * _MIB), hard_cap)),
            ),
        )(x4, w1t, w2)
        return out4.reshape(n, c, t, h, w)

    # -------------------------------------------------------------- two-pass path
    if block_budget_bytes is None:
        block_budget_bytes = 8 * _MIB    # ~0.35us/step overhead < ~10% even on v7x
    budget = min(block_budget_bytes, max((hard_cap - headroom) // 5, 1 * _MIB))
    tile_c, tile_s = _choose_tiles(c, t, s, x.dtype, budget)
    nc_tiles = c // tile_c
    ns_tiles = s // tile_s

    blk_in = _padded_bytes(tile_c, t, tile_s, x.dtype)
    blk_f32 = _padded_bytes(tile_c, t, tile_s, jnp.float32)
    acc_bytes = _padded_bytes(1, t, tile_s, jnp.float32)
    vmem_p1 = int(min(max(2 * blk_in + blk_f32 + acc_bytes + headroom, 16 * _MIB), hard_cap))
    vmem_p2 = int(min(max(4 * blk_in + blk_f32 + headroom, 16 * _MIB), hard_cap))

    # pass 1: temporal squeeze (+ excitation MLP in the epilogue) -> (n, t, 1) gate
    scale = pl.pallas_call(
        functools.partial(_pool_excite_kernel, inv_count=inv_count),
        out_shape=jax.ShapeDtypeStruct((n, t, 1), jnp.float32),
        grid_spec=pltpu.PrefetchScalarGridSpec(
            num_scalar_prefetch=0,
            grid=(n, nc_tiles, ns_tiles),
            in_specs=[
                pl.BlockSpec((1, tile_c, t, tile_s),
                             lambda b, ci, si: (b, ci, 0, si)),
                pl.BlockSpec((t, t_red), lambda b, ci, si: (0, 0)),
                pl.BlockSpec((t, t_red), lambda b, ci, si: (0, 0)),
            ],
            out_specs=pl.BlockSpec((1, t, 1), lambda b, ci, si: (b, 0, 0)),
            scratch_shapes=[pltpu.VMEM((t, tile_s), jnp.float32)],
        ),
        compiler_params=pltpu.CompilerParams(
            dimension_semantics=("parallel", "arbitrary", "arbitrary"),
            vmem_limit_bytes=vmem_p1,
        ),
    )(x4, w1t, w2)

    # pass 2: re-stream x and apply the per-t multiplier (HBM-bound, fully parallel)
    out4 = pl.pallas_call(
        _scale_kernel,
        out_shape=jax.ShapeDtypeStruct((n, c, t, s), x.dtype),
        grid_spec=pltpu.PrefetchScalarGridSpec(
            num_scalar_prefetch=0,
            grid=(n, nc_tiles, ns_tiles),
            in_specs=[
                pl.BlockSpec((1, tile_c, t, tile_s),
                             lambda b, ci, si: (b, ci, 0, si)),
                pl.BlockSpec((1, t, 1), lambda b, ci, si: (b, 0, 0)),
            ],
            out_specs=pl.BlockSpec((1, tile_c, t, tile_s),
                                   lambda b, ci, si: (b, ci, 0, si)),
        ),
        compiler_params=pltpu.CompilerParams(
            dimension_semantics=("parallel", "parallel", "parallel"),
            vmem_limit_bytes=vmem_p2,
        ),
    )(x4, scale)

    return out4.reshape(n, c, t, h, w)


def se_layer_t_reference(x, w1, w2):
    """Pure-JAX reference of SELayerT.forward."""
    b, c, t, h, w = x.shape
    y = jnp.mean(jnp.transpose(x, (0, 2, 1, 3, 4)).reshape(b, t, -1), axis=-1)  # (B, T)
    y = jnp.maximum(y @ w1.T, 0.0)
    y = jax.nn.sigmoid(y @ w2.T) - 0.5
    return x + x * y[:, None, :, None, None]


if __name__ == "__main__":
    # Small but representative video shape: (batch, channel, T, H, W).
    # H*W = 256 is a multiple of 128, so streaming tiles are lane-dense.
    N, C, T, H, W = 2, 16, 8, 16, 16
    reduction = 2                      # SELayerT default
    T_red = T // reduction

    key = jax.random.PRNGKey(0)
    kx, k1, k2 = jax.random.split(key, 3)
    x = jax.random.normal(kx, (N, C, T, H, W), dtype=jnp.float32)
    # nn.Linear(bias=False)-style init for the temporal excitation MLP.
    w1 = jax.random.normal(k1, (T_red, T), dtype=jnp.float32) * (1.0 / np.sqrt(T))
    w2 = jax.random.normal(k2, (T, T_red), dtype=jnp.float32) * (1.0 / np.sqrt(T_red))

    ref = jax.block_until_ready(se_layer_t_reference(x, w1, w2))

    # Fused single-pass path (sample fits in VMEM).
    out_fused = jax.block_until_ready(se_layer_t(x, w1, w2))
    assert out_fused.shape == x.shape
    np.testing.assert_allclose(np.asarray(out_fused), np.asarray(ref),
                               rtol=1e-5, atol=1e-5)

    # Tiled two-pass path (forced with a tiny block budget: tile_c=1, tile_s=128,
    # so the scratch accumulator and multi-tile reduction are exercised too).
    out_tiled = jax.block_until_ready(
        se_layer_t(x, w1, w2, allow_fused=False, block_budget_bytes=4 * 1024))
    np.testing.assert_allclose(np.asarray(out_tiled), np.asarray(ref),
                               rtol=1e-5, atol=1e-5)

    print("KERNEL_OK")
</pallas_src>

<mosaic_0001>
module attributes {stable_mosaic.version = 11 : i64} {
  func.func @_fused_kernel(%arg0: i32, %arg1: memref<1x16x8x256xf32, #tpu.memory_space<vmem>>, %arg2: memref<8x4xf32, #tpu.memory_space<vmem>>, %arg3: memref<8x4xf32, #tpu.memory_space<vmem>>, %arg4: memref<1x16x8x256xf32, #tpu.memory_space<vmem>>) attributes {dimension_semantics = [#tpu.dimension_semantics<parallel>], iteration_bounds = array<i64: 2>, scalar_prefetch = 0 : i64, scratch_operands = 0 : i64, tpu.core_type = #tpu.core_type<tc>, window_params = [{transform_indices = @transform_0, window_bounds = array<i64: 1, 16, 8, 256>}, {pipeline_mode = #tpu.pipeline_mode<synchronous>, transform_indices = @transform_1, window_bounds = array<i64: 8, 4>}, {pipeline_mode = #tpu.pipeline_mode<synchronous>, transform_indices = @transform_2, window_bounds = array<i64: 8, 4>}, {transform_indices = @transform_3, window_bounds = array<i64: 1, 16, 8, 256>}]} {
    %c0 = arith.constant 0 : index
    %c0_0 = arith.constant 0 : index
    %c0_1 = arith.constant 0 : index
    %c0_2 = arith.constant 0 : index
    %0 = vector.load %arg1[%c0, %c0_0, %c0_1, %c0_2] : memref<1x16x8x256xf32, #tpu.memory_space<vmem>>, vector<1x16x8x256xf32>
    %1 = vector.shape_cast %0 : vector<1x16x8x256xf32> to vector<16x8x256xf32>
    %cst = arith.constant dense<0.000000e+00> : vector<8x256xf32>
    %2 = vector.multi_reduction <add>, %1, %cst [0] : vector<16x8x256xf32> to vector<8x256xf32>
    %cst_3 = arith.constant dense<0.000000e+00> : vector<8xf32>
    %3 = vector.multi_reduction <add>, %2, %cst_3 [1] : vector<8x256xf32> to vector<8xf32>
    %4 = vector.shape_cast %3 : vector<8xf32> to vector<8x1xf32>
    %cst_4 = arith.constant 2.44140625E-4 : f32
    %5 = vector.broadcast %cst_4 : f32 to vector<8x1xf32>
    %6 = arith.mulf %4, %5 : vector<8x1xf32>
    %c0_5 = arith.constant 0 : index
    %c0_6 = arith.constant 0 : index
    %7 = vector.load %arg2[%c0_5, %c0_6] : memref<8x4xf32, #tpu.memory_space<vmem>>, vector<8x4xf32>
    %8 = vector.broadcast %6 : vector<8x1xf32> to vector<8x4xf32>
    %9 = arith.mulf %7, %8 : vector<8x4xf32>
    %cst_7 = arith.constant dense<0.000000e+00> : vector<4xf32>
    %10 = vector.multi_reduction <add>, %9, %cst_7 [0] : vector<8x4xf32> to vector<4xf32>
    %11 = vector.shape_cast %10 : vector<4xf32> to vector<1x4xf32>
    %cst_8 = arith.constant 0.000000e+00 : f32
    %12 = vector.broadcast %cst_8 : f32 to vector<1x4xf32>
    %13 = arith.maximumf %11, %12 : vector<1x4xf32>
    %c0_9 = arith.constant 0 : index
    %c0_10 = arith.constant 0 : index
    %14 = vector.load %arg3[%c0_9, %c0_10] : memref<8x4xf32, #tpu.memory_space<vmem>>, vector<8x4xf32>
    %15 = vector.broadcast %13 : vector<1x4xf32> to vector<8x4xf32>
    %16 = arith.mulf %14, %15 : vector<8x4xf32>
    %cst_11 = arith.constant dense<0.000000e+00> : vector<8xf32>
    %17 = vector.multi_reduction <add>, %16, %cst_11 [1] : vector<8x4xf32> to vector<8xf32>
    %18 = vector.shape_cast %17 : vector<8xf32> to vector<8x1xf32>
    %19 = arith.negf %18 : vector<8x1xf32>
    %20 = math.exp %19 : vector<8x1xf32>
    %cst_12 = arith.constant 1.000000e+00 : f32
    %21 = vector.broadcast %cst_12 : f32 to vector<8x1xf32>
    %22 = arith.addf %21, %20 : vector<8x1xf32>
    %23 = arith.divf %21, %22 : vector<8x1xf32>
    %cst_13 = arith.constant 5.000000e-01 : f32
    %24 = vector.broadcast %cst_13 : f32 to vector<8x1xf32>
    %25 = arith.addf %24, %23 : vector<8x1xf32>
    %26 = vector.shape_cast %25 : vector<8x1xf32> to vector<1x8x1xf32>
    %27 = vector.broadcast %26 : vector<1x8x1xf32> to vector<16x8x256xf32>
    %28 = arith.mulf %1, %27 : vector<16x8x256xf32>
    %c0_14 = arith.constant 0 : index
    %c0_15 = arith.constant 0 : index
    %c0_16 = arith.constant 0 : index
    %c0_17 = arith.constant 0 : index
    %29 = vector.load %arg4[%c0_14, %c0_15, %c0_16, %c0_17] : memref<1x16x8x256xf32, #tpu.memory_space<vmem>>, vector<1x16x8x256xf32>
    %30 = vector.shape_cast %29 : vector<1x16x8x256xf32> to vector<16x8x256xf32>
    %31 = vector.shape_cast %28 : vector<16x8x256xf32> to vector<1x16x8x256xf32>
    tpu.vector_store %arg4[%c0_14, %c0_15, %c0_16, %c0_17], %31 {strides = array<i32>} : memref<1x16x8x256xf32, #tpu.memory_space<vmem>>, vector<1x16x8x256xf32>,
    return
  }
  func.func @transform_0(%arg0: i32) -> (i32, i32, i32, i32) {
    %c0_i32 = arith.constant 0 : i32
    %c0_i32_0 = arith.constant 0 : i32
    %c0_i32_1 = arith.constant 0 : i32
    %c0_i32_2 = arith.constant 0 : i32
    return %arg0, %c0_i32, %c0_i32_0, %c0_i32_1 : i32, i32, i32, i32
  }
  func.func @transform_1(%arg0: i32) -> (i32, i32) {
    %c0_i32 = arith.constant 0 : i32
    %c0_i32_0 = arith.constant 0 : i32
    %c0_i32_1 = arith.constant 0 : i32
    return %c0_i32, %c0_i32_0 : i32, i32
  }
  func.func @transform_2(%arg0: i32) -> (i32, i32) {
    %c0_i32 = arith.constant 0 : i32
    %c0_i32_0 = arith.constant 0 : i32
    %c0_i32_1 = arith.constant 0 : i32
    return %c0_i32, %c0_i32_0 : i32, i32
  }
  func.func @transform_3(%arg0: i32) -> (i32, i32, i32, i32) {
    %c0_i32 = arith.constant 0 : i32
    %c0_i32_0 = arith.constant 0 : i32
    %c0_i32_1 = arith.constant 0 : i32
    %c0_i32_2 = arith.constant 0 : i32
    return %arg0, %c0_i32, %c0_i32_0, %c0_i32_1 : i32, i32, i32, i32
  }
}

</mosaic_0001>

<llo_original>
// kernel: tpu_custom_call.1
$region0: #{tpu_custom_call.1}
  #allocation0 [shape = 'u32[]', space=smem, size = 0x4, offset = 0x4, fixed_abs, tag = 'smem constant byte address 0x4 - core index']
  #allocation1 [shape = 'u32[144,128]{1,0:T(1,128)}', space=vmem, size = 0x12000, scoped, tag = 'internal scratch']
  %s0 = inlined_call_operand.hbm [shape: f32[2,16,8,256], index: 0, kind: input, shape index: {}]
  %s1 = inlined_call_operand.vmem [shape: f32[8,4], index: 1, kind: input, shape index: {}]
  %s2 = inlined_call_operand.vmem [shape: f32[8,4], index: 2, kind: input, shape index: {}]
  %s3 = inlined_call_operand.hbm [shape: f32[2,16,8,256], index: 3, kind: output, shape index: {}]
  %s4 = sld [smem:[#allocation0]]
  $region49: #{tpu_custom_call.1} parent=0
    _
  %s6 = ssub.s32 1, %s4
  %s7 = scalar_select 0, %s6, %s4
  $region1: #{tpu_custom_call.1} parent=0
    #allocation2 [shape = 'u8[262144]{0}', space=vmem, size = 0x40000, scoped, tag = 'input window, operand 0']
    #allocation3 [shape = 's32[2]{0}', space=sflag, size = 0x8, scoped, tag = 'scoped memory for tpu_custom_call.1']
    #allocation4 [shape = 's32[2]{0}', space=sflag, size = 0x8, scoped, tag = 'scoped memory for tpu_custom_call.1']
    #allocation5 [shape = 'u8[262144]{0}', space=vmem, size = 0x40000, scoped, tag = 'output window, operand 0']
    %8 = vsyncpa [#allocation3], 0
    %s9 = scalar_lea.sflag [#allocation3], 1
    %10 = vsyncpa %s9, 0
    %11 = vsyncpa [#allocation4], 0
    %s12 = scalar_lea.sflag [#allocation4], 1
    %13 = vsyncpa %s12, 0
    loop: start=0, step=1, limit=4
    $region2: #{tpu_custom_call.1} parent=1 // loop_pre_header
      _
    $region3: #{tpu_custom_call.1} parent=1 // loop_header
      %s15 = sphi 0, %s19
      %p16 = scmp.ge.s32.totalorder %s15, 4
      %s25 = sphi 0, %s27
      %s28 = sphi 0, %s25
      %s29 = sphi 0, %s28
      %s45 = sphi 0, %s29
      %s49 = sphi 0, %s49
      %s51 = sphi 0, %s49
      %s52 = sphi 0, %s51
      %s66 = sphi 0, %s52
      %s70 = sphi 0, %s70
      %s72 = sphi 0, %s70
      %s73 = sphi 0, %s72
      %s87 = sphi 0, %s73
      %s93 = sphi 0, %s95
      %s96 = sphi 0, %s93
      %s97 = sphi 0, %s96
      %s113 = sphi 0, %s97
    $region4: #{tpu_custom_call.1} parent=1 // loop_header_branch
      %18 = sbr.rel (%p16) target = $region8
    $region5: #{tpu_custom_call.1} parent=1 // loop_body
      %s20 = ssub.s32 %s15, 1
      %s21 = ssub.s32 %s15, 2
      %s22 = sadd.s32 %s15, 1
      %s23 = ssub.s32 %s15, %s22
      %p24 = scmp.eq.s32.totalorder %s23, 0
      %s26 = sadd.s32 %s25, 1
      %s27 = scalar_select %p24, %s25, %s26
      %p30 = pneg %p24
      %p31 = scmp.eq.s32.totalorder %s15, 1
      %p32 = por %p30, %p31
      %p33 = scmp.ne.s32.totalorder %s25, %s28
      %p34 = scmp.eq.s32.totalorder %s15, 0
      %p35 = por %p33, %p34
      %p36 = scmp.ne.s32.totalorder %s25, %s28
      %p37 = scmp.eq.s32.totalorder %s20, 1
      %p38 = por %p36, %p37
      %p39 = scmp.ne.s32.totalorder %s28, %s29
      %p40 = scmp.eq.s32.totalorder %s20, 0
      %p41 = por %p39, %p40
      %p42 = scmp.ne.s32.totalorder %s28, %s29
      %p43 = scmp.eq.s32.totalorder %s21, 1
      %p44 = por %p42, %p43
      %p46 = scmp.ne.s32.totalorder %s29, %s45
      %p47 = scmp.eq.s32.totalorder %s21, 0
      %p48 = por %p46, %p47
      %s50 = sadd.s32 %s49, 1
      %p53 = scmp.eq.s32.totalorder %s15, 1
      %p54 = scmp.ne.s32.totalorder %s49, %s51
      %p55 = scmp.eq.s32.totalorder %s15, 0
      %p56 = por %p54, %p55
      %p57 = scmp.ne.s32.totalorder %s49, %s51
      %p58 = scmp.eq.s32.totalorder %s20, 1
      %p59 = por %p57, %p58
      %p60 = scmp.ne.s32.totalorder %s51, %s52
      %p61 = scmp.eq.s32.totalorder %s20, 0
      %p62 = por %p60, %p61
      %p63 = scmp.ne.s32.totalorder %s51, %s52
      %p64 = scmp.eq.s32.totalorder %s21, 1
      %p65 = por %p63, %p64
      %p67 = scmp.ne.s32.totalorder %s52, %s66
      %p68 = scmp.eq.s32.totalorder %s21, 0
      %p69 = por %p67, %p68
      %s71 = sadd.s32 %s70, 1
      %p74 = scmp.eq.s32.totalorder %s15, 1
      %p75 = scmp.ne.s32.totalorder %s70, %s72
      %p76 = scmp.eq.s32.totalorder %s15, 0
      %p77 = por %p75, %p76
      %p78 = scmp.ne.s32.totalorder %s70, %s72
      %p79 = scmp.eq.s32.totalorder %s20, 1
      %p80 = por %p78, %p79
      %p81 = scmp.ne.s32.totalorder %s72, %s73
      %p82 = scmp.eq.s32.totalorder %s20, 0
      %p83 = por %p81, %p82
      %p84 = scmp.ne.s32.totalorder %s72, %s73
      %p85 = scmp.eq.s32.totalorder %s21, 1
      %p86 = por %p84, %p85
      %p88 = scmp.ne.s32.totalorder %s73, %s87
      %p89 = scmp.eq.s32.totalorder %s21, 0
      %p90 = por %p88, %p89
      %s91 = ssub.s32 %s15, %s22
      %p92 = scmp.eq.s32.totalorder %s91, 0
      %s94 = sadd.s32 %s93, 1
      %s95 = scalar_select %p92, %s93, %s94
      %p98 = pneg %p92
      %p99 = scmp.eq.s32.totalorder %s15, 1
      %p100 = por %p98, %p99
      %p101 = scmp.ne.s32.totalorder %s93, %s96
      %p102 = scmp.eq.s32.totalorder %s15, 0
      %p103 = por %p101, %p102
      %p104 = scmp.ne.s32.totalorder %s93, %s96
      %p105 = scmp.eq.s32.totalorder %s20, 1
      %p106 = por %p104, %p105
      %p107 = scmp.ne.s32.totalorder %s96, %s97
      %p108 = scmp.eq.s32.totalorder %s20, 0
      %p109 = por %p107, %p108
      %p110 = scmp.ne.s32.totalorder %s96, %s97
      %p111 = scmp.eq.s32.totalorder %s21, 1
      %p112 = por %p110, %p111
      %p114 = scmp.ne.s32.totalorder %s97, %s113
      %p115 = scmp.eq.s32.totalorder %s21, 0
      %p116 = por %p114, %p115
      %p117 = scmp.le.s32.totalorder 1, %s15
      %p118 = scmp.lt.s32.totalorder %s15, 3
      %p119 = pnand %p117, %p118
      %p120 = pneg %p119
      // Predicated region
      $region9: #{tpu_custom_call.1} parent=5 // pred_check
        _
      $region10: #{tpu_custom_call.1} parent=5 // pred_check_branch
        %122 = sbr.rel (%p119) target = $region12
      $region11: #{tpu_custom_call.1} parent=5 // pred_region
        %s123 = ssub.s32 %s15, 1
        // Predicated region
        $region13: #{tpu_custom_call.1} parent=11 // pred_check
          %p124 = pneg %p62
        $region14: #{tpu_custom_call.1} parent=11 // pred_check_branch
          %126 = sbr.rel (%p124) target = $region16
        $region15: #{tpu_custom_call.1} parent=11 // pred_region
          _
        $region16: #{tpu_custom_call.1} parent=11 // pred_fallthru
          _
        // Predicated region
        $region17: #{tpu_custom_call.1} parent=11 // pred_check
          %p127 = pneg %p83
        $region18: #{tpu_custom_call.1} parent=11 // pred_check_branch
          %129 = sbr.rel (%p127) target = $region20
        $region19: #{tpu_custom_call.1} parent=11 // pred_region
          _
        $region20: #{tpu_custom_call.1} parent=11 // pred_fallthru
          _
      $region12: #{tpu_custom_call.1} parent=5 // pred_fallthru
        _
      %p130 = scmp.lt.s32.totalorder %s15, 2
      // Predicated region
      $region21: #{tpu_custom_call.1} parent=5 // pred_check
        %p131 = pneg %p130
      $region22: #{tpu_custom_call.1} parent=5 // pred_check_branch
        %133 = sbr.rel (%p131) target = $region24
      $region23: #{tpu_custom_call.1} parent=5 // pred_region
        // Predicated region
        $region25: #{tpu_custom_call.1} parent=23 // pred_check
          %p134 = pneg %p35
        $region26: #{tpu_custom_call.1} parent=23 // pred_check_branch
          %136 = sbr.rel (%p134) target = $region28
        $region27: #{tpu_custom_call.1} parent=23 // pred_region
          %s137 = sand.u32 %s25, 1
          %s138 = scalar_lea.sflag [#allocation3], %s137
          %s139 = sand.u32 %s25, 1
          %s140 = smul.addr %s139, 256
          %s141 = scalar_lea.vmem [#allocation2], %s140
          %s143 = ssub.s32 4096, 4096
          %144 = vsyncadd %s138, %s143
          %s145 = smul.addr %s15, 32
          %s146 = smul.addr %s145, 128
          %s147 = scalar_lea.hbm %s0, %s146
          %s148 = sshll.u32 %s141, 4
          %s149 = int_to_ptr.vmem [resolvable:$true] %s148
          %154 = dma.hbm_to_vmem [thread:$0]  %s147, 4096, %s149, %s138, 256, 256, 16
        $region28: #{tpu_custom_call.1} parent=23 // pred_fallthru
          _
      $region24: #{tpu_custom_call.1} parent=5 // pred_fallthru
        _
      %p155 = scmp.le.s32.totalorder 1, %s15
      %p156 = scmp.lt.s32.totalorder %s15, 3
      %p157 = pnand %p155, %p156
      %p158 = pneg %p157
      // Predicated region
      $region29: #{tpu_custom_call.1} parent=5 // pred_check
        _
      $region30: #{tpu_custom_call.1} parent=5 // pred_check_branch
        %160 = sbr.rel (%p157) target = $region32
      $region31: #{tpu_custom_call.1} parent=5 // pred_region
        %s161 = ssub.s32 %s15, 1
        %s162 = sand.u32 %s28, 1
        %s163 = scalar_lea.sflag [#allocation3], %s162
        %s164 = sand.u32 %s28, 1
        %s165 = smul.addr %s164, 256
        %s166 = scalar_lea.vmem [#allocation2], %s165
        // Predicated region
        $region33: #{tpu_custom_call.1} parent=31 // pred_check
          %p167 = pneg %p41
        $region34: #{tpu_custom_call.1} parent=31 // pred_check_branch
          %169 = sbr.rel (%p167) target = $region36
        $region35: #{tpu_custom_call.1} parent=31 // pred_region
          %170 = dma.done %s163, 4096
        $region36: #{tpu_custom_call.1} parent=31 // pred_fallthru
          _
        %s171 = sand.u32 %s28, 1
        %s172 = scalar_lea.sflag [#allocation3], %s171
        %s173 = sand.u32 %s28, 1
        %s174 = smul.addr %s173, 256
        %s175 = scalar_lea.vmem [#allocation2], %s174
        %p176 = pneg %p41
        %p177 = pneg %p38
        %p178 = pneg %p62
        %p179 = pneg %p59
        %p180 = pneg %p83
        %p181 = pneg %p80
        %p182 = pneg %p109
        %p183 = pneg %p106
        %s184 = sand.u32 %s96, 1
        %s185 = scalar_lea.sflag [#allocation4], %s184
        %s186 = sand.u32 %s96, 1
        %s187 = smul.addr %s186, 256
        %s188 = scalar_lea.vmem [#allocation5], %s187
        %v189 = vld [vmem:[%s166] sm:$0xff]
        %v190 = vld [vmem:[%s166 + $0x8] sm:$0xff]
        %v191 = vld [vmem:[%s166 + $0x10] sm:$0xff]
        %v192 = vld [vmem:[%s166 + $0x18] sm:$0xff]
        %v193 = vld [vmem:[%s166 + $0x20] sm:$0xff]
        %v194 = vld [vmem:[%s166 + $0x28] sm:$0xff]
        %v195 = vld [vmem:[%s166 + $0x30] sm:$0xff]
        %v196 = vld [vmem:[%s166 + $0x38] sm:$0xff]
        %v197 = vld [vmem:[%s166 + $0x40] sm:$0xff]
        %v198 = vld [vmem:[%s166 + $0x48] sm:$0xff]
        %v199 = vld [vmem:[%s166 + $0x50] sm:$0xff]
        %v200 = vld [vmem:[%s166 + $0x58] sm:$0xff]
        %v201 = vld [vmem:[%s166 + $0x60] sm:$0xff]
        %v202 = vld [vmem:[%s166 + $0x68] sm:$0xff]
        %v203 = vld [vmem:[%s166 + $0x70] sm:$0xff]
        %v204 = vld [vmem:[%s166 + $0x78] sm:$0xff]
        %v205 = vld [vmem:[%s166 + $0x80] sm:$0xff]
        %v206 = vld [vmem:[%s166 + $0x88] sm:$0xff]
        %v207 = vld [vmem:[%s166 + $0x90] sm:$0xff]
        %v208 = vld [vmem:[%s166 + $0x98] sm:$0xff]
        %v209 = vld [vmem:[%s166 + $0xa0] sm:$0xff]
        %v210 = vld [vmem:[%s166 + $0xa8] sm:$0xff]
        %v211 = vld [vmem:[%s166 + $0xb0] sm:$0xff]
        %v212 = vld [vmem:[%s166 + $0xb8] sm:$0xff]
        %v213 = vld [vmem:[%s166 + $0xc0] sm:$0xff]
        %v214 = vld [vmem:[%s166 + $0xc8] sm:$0xff]
        %v215 = vld [vmem:[%s166 + $0xd0] sm:$0xff]
        %v216 = vld [vmem:[%s166 + $0xd8] sm:$0xff]
        %v217 = vld [vmem:[%s166 + $0xe0] sm:$0xff]
        %v218 = vld [vmem:[%s166 + $0xe8] sm:$0xff]
        %v219 = vld [vmem:[%s166 + $0xf0] sm:$0xff]
        %v220 = vld [vmem:[%s166 + $0xf8] sm:$0xff]
        %v221 = vadd.f32 %v189, %v191
        %v222 = vadd.f32 %v221, %v193
        %v223 = vadd.f32 %v222, %v195
        %v224 = vadd.f32 %v223, %v197
        %v225 = vadd.f32 %v224, %v199
        %v226 = vadd.f32 %v225, %v201
        %v227 = vadd.f32 %v226, %v203
        %v228 = vadd.f32 %v227, %v205
        %v229 = vadd.f32 %v228, %v207
        %v230 = vadd.f32 %v229, %v209
        %v231 = vadd.f32 %v230, %v211
        %v232 = vadd.f32 %v231, %v213
        %v233 = vadd.f32 %v232, %v215
        %v234 = vadd.f32 %v233, %v217
        %v235 = vadd.f32 %v234, %v219
        %v236 = vadd.f32 %v190, %v192
        %v237 = vadd.f32 %v236, %v194
        %v238 = vadd.f32 %v237, %v196
        %v239 = vadd.f32 %v238, %v198
        %v240 = vadd.f32 %v239, %v200
        %v241 = vadd.f32 %v240, %v202
        %v242 = vadd.f32 %v241, %v204
        %v243 = vadd.f32 %v242, %v206
        %v244 = vadd.f32 %v243, %v208
        %v245 = vadd.f32 %v244, %v210
        %v246 = vadd.f32 %v245, %v212
        %v247 = vadd.f32 %v246, %v214
        %v248 = vadd.f32 %v247, %v216
        %v249 = vadd.f32 %v248, %v218
        %v250 = vadd.f32 %v249, %v220
        %v251 = vadd.f32 %v235, %v250
        %252 = vadd.xlane.f32.xlu0 %v251
        %v253 = vpop.xlane.xlu0 %252
        %v254 = vmul.f32 %v253, 0.00024414063
        %v255 = vld [vmem:[%s1] sm:$0xff]
        %v256 = vmul.f32 %v255, %v254
        %vm257 = vcmask 31744
        %v258 = vsel %vm257, %v256, 0.0
        %v259 = vrot.slane %v258, 4
        %v260 = vadd.f32 %v258, %v259
        %v261 = vrot.slane %v260, 2
        %v262 = vadd.f32 %v260, %v261
        %v263 = vrot.slane %v262, 1
        %v264 = vadd.f32 %v262, %v263
        %v265 = vmax.f32 %v264, 0.0
        %v266 = vld [vmem:[%s2] sm:$0xff]
        %v267 = vmul.f32 %v266, %v265
        %v268 = vsel %vm257, %v267, 0.0
        %269 = vadd.xlane.f32.xlu0 %v268
        %v270 = vpop.xlane.xlu0 %269
        %v271 = vxor.u32 %v270, 2147483648
        %v272 = vmul.f32 %v271, 1.442695
        %v273 = vpow.pop %v272
        %v274 = vadd.f32 %v273, 1.0
        %v275 = vrcp.pop %v274
        %v276 = vmul.f32 1.0, %v275
        %v277 = vadd.f32 %v276, 0.5
        %v278 = vmul.f32 %v189, %v277
        %v279 = vmul.f32 %v190, %v277
        %v280 = vmul.f32 %v191, %v277
        %v281 = vmul.f32 %v192, %v277
        %v282 = vmul.f32 %v193, %v277
        %v283 = vmul.f32 %v194, %v277
        %v284 = vmul.f32 %v195, %v277
        %v285 = vmul.f32 %v196, %v277
        %v286 = vmul.f32 %v197, %v277
        %v287 = vmul.f32 %v198, %v277
        %v288 = vmul.f32 %v199, %v277
        %v289 = vmul.f32 %v200, %v277
        %v290 = vmul.f32 %v201, %v277
        %v291 = vmul.f32 %v202, %v277
        %v292 = vmul.f32 %v203, %v277
        %v293 = vmul.f32 %v204, %v277
        %v294 = vmul.f32 %v205, %v277
        %v295 = vmul.f32 %v206, %v277
        %v296 = vmul.f32 %v207, %v277
        %v297 = vmul.f32 %v208, %v277
        %v298 = vmul.f32 %v209, %v277
        %v299 = vmul.f32 %v210, %v277
        %v300 = vmul.f32 %v211, %v277
        %v301 = vmul.f32 %v212, %v277
        %v302 = vmul.f32 %v213, %v277
        %v303 = vmul.f32 %v214, %v277
        %v304 = vmul.f32 %v215, %v277
        %v305 = vmul.f32 %v216, %v277
        %v306 = vmul.f32 %v217, %v277
        %v307 = vmul.f32 %v218, %v277
        %v308 = vmul.f32 %v219, %v277
        %v309 = vmul.f32 %v220, %v277
        %310 = vst [vmem:[%s188] sm:$0xff] %v278
        %311 = vst [vmem:[%s188 + $0x8] sm:$0xff] %v279
        %312 = vst [vmem:[%s188 + $0x10] sm:$0xff] %v280
        %313 = vst [vmem:[%s188 + $0x18] sm:$0xff] %v281
        %314 = vst [vmem:[%s188 + $0x20] sm:$0xff] %v282
        %315 = vst [vmem:[%s188 + $0x28] sm:$0xff] %v283
        %316 = vst [vmem:[%s188 + $0x30] sm:$0xff] %v284
        %317 = vst [vmem:[%s188 + $0x38] sm:$0xff] %v285
        %318 = vst [vmem:[%s188 + $0x40] sm:$0xff] %v286
        %319 = vst [vmem:[%s188 + $0x48] sm:$0xff] %v287
        %320 = vst [vmem:[%s188 + $0x50] sm:$0xff] %v288
        %321 = vst [vmem:[%s188 + $0x58] sm:$0xff] %v289
        %322 = vst [vmem:[%s188 + $0x60] sm:$0xff] %v290
        %323 = vst [vmem:[%s188 + $0x68] sm:$0xff] %v291
        %324 = vst [vmem:[%s188 + $0x70] sm:$0xff] %v292
        %325 = vst [vmem:[%s188 + $0x78] sm:$0xff] %v293
        %326 = vst [vmem:[%s188 + $0x80] sm:$0xff] %v294
        %327 = vst [vmem:[%s188 + $0x88] sm:$0xff] %v295
        %328 = vst [vmem:[%s188 + $0x90] sm:$0xff] %v296
        %329 = vst [vmem:[%s188 + $0x98] sm:$0xff] %v297
        %330 = vst [vmem:[%s188 + $0xa0] sm:$0xff] %v298
        %331 = vst [vmem:[%s188 + $0xa8] sm:$0xff] %v299
        %332 = vst [vmem:[%s188 + $0xb0] sm:$0xff] %v300
        %333 = vst [vmem:[%s188 + $0xb8] sm:$0xff] %v301
        %334 = vst [vmem:[%s188 + $0xc0] sm:$0xff] %v302
        %335 = vst [vmem:[%s188 + $0xc8] sm:$0xff] %v303
        %336 = vst [vmem:[%s188 + $0xd0] sm:$0xff] %v304
        %337 = vst [vmem:[%s188 + $0xd8] sm:$0xff] %v305
        %338 = vst [vmem:[%s188 + $0xe0] sm:$0xff] %v306
        %339 = vst [vmem:[%s188 + $0xe8] sm:$0xff] %v307
        %340 = vst [vmem:[%s188 + $0xf0] sm:$0xff] %v308
        %341 = vst [vmem:[%s188 + $0xf8] sm:$0xff] %v309
        %s342 = sand.u32 %s96, 1
        %s343 = scalar_lea.sflag [#allocation4], %s342
        %s344 = sand.u32 %s96, 1
        %s345 = smul.addr %s344, 256
        %s346 = scalar_lea.vmem [#allocation5], %s345
        // Predicated region
        $region37: #{tpu_custom_call.1} parent=31 // pred_check
          %p347 = pneg %p106
        $region38: #{tpu_custom_call.1} parent=31 // pred_check_branch
          %349 = sbr.rel (%p347) target = $region40
        $region39: #{tpu_custom_call.1} parent=31 // pred_region
          %s351 = ssub.s32 4096, 4096
          %352 = vsyncadd %s343, %s351
          %s353 = smul.addr %s20, 32
          %s354 = smul.addr %s353, 128
          %s355 = scalar_lea.hbm %s3, %s354
          %s356 = sshll.u32 %s346, 4
          %s357 = int_to_ptr.vmem [resolvable:$true] %s356
          %362 = dma.vmem_to_hbm [thread:$0]  %s357, 4096, %s355, %s343, 256, 256, 16
        $region40: #{tpu_custom_call.1} parent=31 // pred_fallthru
          _
      $region32: #{tpu_custom_call.1} parent=5 // pred_fallthru
        _
      %p363 = scmp.le.s32.totalorder 2, %s15
      // Predicated region
      $region41: #{tpu_custom_call.1} parent=5 // pred_check
        %p364 = pneg %p363
      $region42: #{tpu_custom_call.1} parent=5 // pred_check_branch
        %366 = sbr.rel (%p364) target = $region44
      $region43: #{tpu_custom_call.1} parent=5 // pred_region
        %s367 = ssub.s32 %s15, 2
        // Predicated region
        $region45: #{tpu_custom_call.1} parent=43 // pred_check
          %p368 = pneg %p112
        $region46: #{tpu_custom_call.1} parent=43 // pred_check_branch
          %370 = sbr.rel (%p368) target = $region48
        $region47: #{tpu_custom_call.1} parent=43 // pred_region
          %s371 = sand.u32 %s97, 1
          %s372 = scalar_lea.sflag [#allocation4], %s371
          %s373 = sand.u32 %s97, 1
          %s374 = smul.addr %s373, 256
          %s375 = scalar_lea.vmem [#allocation5], %s374
          %376 = dma.done %s372, 4096
        $region48: #{tpu_custom_call.1} parent=43 // pred_fallthru
          _
      $region44: #{tpu_custom_call.1} parent=5 // pred_fallthru
        _
    $region6: #{tpu_custom_call.1} parent=1 // loop_footer
      %s19 = sadd.s32 1, %s15
    $region7: #{tpu_custom_call.1} parent=1 // loop_footer_branch
      %14 = sbr.rel target = $region3
    $region8: #{tpu_custom_call.1} parent=1 // loop_exit
      _
    %377 = vsyncpa [#allocation3], 1
    %s378 = scalar_lea.sflag [#allocation3], 1
    %379 = vsyncpa %s378, 1
    %380 = vsyncpa [#allocation4], 1
    %s381 = scalar_lea.sflag [#allocation4], 1
    %382 = vsyncpa %s381, 1

</llo_original>
